<compile_context>
chip_gen: v7x
topology: tpu7x:2x2x1
jax: 0.10.0
libtpu: 0.0.40
codegen_flags: <defaults>
</compile_context>

<pallas_src>
import functools

import jax
import jax.numpy as jnp
import numpy as np
from jax.experimental import pallas as pl
from jax.experimental.pallas import tpu as pltpu


def _mlp_kernel(x_ref, w1_ref, b1_ref, w2_ref, b2_ref, w3_ref, b3_ref, o_ref):
    # One batch tile resident in VMEM: 3 MXU matmuls (bf16 in, f32 acc) fused
    # with bias + ReLU + sigmoid on the VPU/EUP (f32 epilogue: v5e has no bf16 VALU).
    x = x_ref[...].astype(jnp.bfloat16)  # (bt, F) cast in-kernel, F left at 147

    h1 = jnp.dot(x, w1_ref[...], preferred_element_type=jnp.float32) + b1_ref[...]
    h1 = jnp.maximum(h1, 0.0)

    h2 = jnp.dot(h1.astype(jnp.bfloat16), w2_ref[...],
                 preferred_element_type=jnp.float32) + b2_ref[...]
    h2 = jnp.maximum(h2, 0.0)

    # Final layer: contract w3 row (1, H2p) against h2 (bt, H2p) over H2 ->
    # lane-major (1, bt) logit row (lane-dense store, no padded columns).
    logit = jax.lax.dot_general(
        w3_ref[...], h2.astype(jnp.bfloat16),
        dimension_numbers=(((1,), (1,)), ((), ())),
        preferred_element_type=jnp.float32) + b3_ref[...]
    o_ref[...] = jax.nn.sigmoid(logit).astype(o_ref.dtype)


def _round_up(n, m):
    return ((n + m - 1) // m) * m


def prepare_params(w1, b1, w2, b2, w3, b3):
    """One-time weight prep: pad hidden dims to 128 multiples, cast to bf16.

    Zero padding is exact: padded hidden units see zero weight + zero bias,
    relu(0)=0, and contribute nothing downstream.
    """
    F, H = w1.shape
    H2 = w2.shape[1]
    H_pad = _round_up(H, 128)
    H2_pad = _round_up(H2, 128)
    f32, bf16 = jnp.float32, jnp.bfloat16

    w1p = jnp.zeros((F, H_pad), bf16).at[:, :H].set(w1.astype(bf16))          # K unpadded (147)
    b1p = jnp.zeros((1, H_pad), f32).at[:, :H].set(jnp.reshape(b1, (1, H)).astype(f32))
    w2p = jnp.zeros((H_pad, H2_pad), bf16).at[:H, :H2].set(w2.astype(bf16))
    b2p = jnp.zeros((1, H2_pad), f32).at[:, :H2].set(jnp.reshape(b2, (1, H2)).astype(f32))
    # Last layer stored lane-major as a (1, H2_pad) row -> (1, bt) logit output.
    w3p = jnp.zeros((1, H2_pad), bf16).at[:, :H2].set(jnp.reshape(w3, (1, H2)).astype(bf16))
    b3p = jnp.reshape(b3, (1, 1)).astype(f32)
    return w1p, b1p, w2p, b2p, w3p, b3p


@functools.partial(jax.jit, static_argnames=("batch_tile",))
def simple_mlp_forward(x, w1p, b1p, w2p, b2p, w3p, b3p, *, batch_tile=512):
    B, F = x.shape
    assert w1p.shape[0] == F, "prepare_params feature dim mismatch"
    H_pad = w1p.shape[1]
    H2_pad = w2p.shape[1]

    # Batch tile: multiple of 128 for the streamed/ragged path; for B >= 256
    # keep >= 2 grid steps so v7x megacore can shard across both TensorCores;
    # for tiny batches use a single exact-size tile (block == full array dims).
    bt = min(_round_up(batch_tile, 128), _round_up(B, 128))
    if B >= 2 * 128:
        bt = min(bt, _round_up(pl.cdiv(B, 2), 128))
    if B <= 128:
        bt = B
    n_tiles = pl.cdiv(B, bt)

    out = pl.pallas_call(
        _mlp_kernel,
        out_shape=jax.ShapeDtypeStruct((1, B), jnp.float32),
        grid_spec=pltpu.PrefetchScalarGridSpec(
            num_scalar_prefetch=0,
            grid=(n_tiles,),
            in_specs=[
                pl.BlockSpec((bt, F), lambda i: (i, 0)),          # x tile (streamed, f32, unpadded K)
                pl.BlockSpec((F, H_pad), lambda i: (0, 0)),       # W1 (resident)
                pl.BlockSpec((1, H_pad), lambda i: (0, 0)),       # b1
                pl.BlockSpec((H_pad, H2_pad), lambda i: (0, 0)),  # W2
                pl.BlockSpec((1, H2_pad), lambda i: (0, 0)),      # b2
                pl.BlockSpec((1, H2_pad), lambda i: (0, 0)),      # W3 as lane-major row
                pl.BlockSpec((1, 1), lambda i: (0, 0)),           # b3
            ],
            out_specs=pl.BlockSpec((1, bt), lambda i: (0, i)),    # lane-major logit row
        ),
        compiler_params=pltpu.CompilerParams(
            dimension_semantics=("parallel",),
        ),
    )(x, w1p, b1p, w2p, b2p, w3p, b3p)

    # Row 0 holds sigmoid(logit) per batch element; mirrors torch's .squeeze().
    return out[0]


def init_params(key, num_features=147, hidden_size=256):
    # Deterministic synthetic init matching torch.nn.Linear shapes
    # (stored transposed as (in, out)).
    k1, k2, k3, k4, k5, k6 = jax.random.split(key, 6)
    h2 = hidden_size // 2

    def lin_init(kw, kb, fan_in, fan_out):
        bound = 1.0 / np.sqrt(fan_in)
        w = jax.random.uniform(kw, (fan_in, fan_out), jnp.float32, -bound, bound)
        b = jax.random.uniform(kb, (1, fan_out), jnp.float32, -bound, bound)
        return w, b

    w1, b1 = lin_init(k1, k2, num_features, hidden_size)
    w2, b2 = lin_init(k3, k4, hidden_size, h2)
    w3, b3 = lin_init(k5, k6, h2, 1)
    return w1, b1, w2, b2, w3, b3


def reference_forward(x, w1, b1, w2, b2, w3, b3):
    h1 = jnp.maximum(x @ w1 + b1, 0.0)
    h2 = jnp.maximum(h1 @ w2 + b2, 0.0)
    return jnp.squeeze(jax.nn.sigmoid(h2 @ w3 + b3), axis=-1)


if __name__ == "__main__":
    key = jax.random.PRNGKey(0)
    kx1, kx2, kp = jax.random.split(key, 3)

    F, H = 147, 256
    params = init_params(kp, num_features=F, hidden_size=H)
    prepped = prepare_params(*params)  # one-time pad/cast, reused across calls

    # Small-batch path (single exact tile, no padding anywhere).
    B1 = 16
    x1 = jax.random.normal(kx1, (B1, F), dtype=jnp.float32)
    y1 = jax.block_until_ready(simple_mlp_forward(x1, *prepped))
    np.testing.assert_allclose(
        np.asarray(y1), np.asarray(reference_forward(x1, *params)),
        rtol=2e-2, atol=2e-2)  # bf16 MXU inputs (f32 accumulation) => loosened tolerance

    # Multi-tile path with a ragged last batch tile (B % bt != 0).
    B2 = 300
    x2 = jax.random.normal(kx2, (B2, F), dtype=jnp.float32)
    y2 = jax.block_until_ready(simple_mlp_forward(x2, *prepped))
    np.testing.assert_allclose(
        np.asarray(y2), np.asarray(reference_forward(x2, *params)),
        rtol=2e-2, atol=2e-2)

    print("KERNEL_OK")
</pallas_src>

<mosaic_0001>
module attributes {stable_mosaic.version = 11 : i64} {
  func.func @_mlp_kernel(%arg0: i32, %arg1: memref<16x147xf32, #tpu.memory_space<vmem>>, %arg2: memref<147x256xbf16, #tpu.memory_space<vmem>>, %arg3: memref<1x256xf32, #tpu.memory_space<vmem>>, %arg4: memref<256x128xbf16, #tpu.memory_space<vmem>>, %arg5: memref<1x128xf32, #tpu.memory_space<vmem>>, %arg6: memref<1x128xbf16, #tpu.memory_space<vmem>>, %arg7: memref<1x1xf32, #tpu.memory_space<vmem>>, %arg8: memref<1x16xf32, #tpu.memory_space<vmem>>) attributes {dimension_semantics = [#tpu.dimension_semantics<parallel>], iteration_bounds = array<i64: 1>, scalar_prefetch = 0 : i64, scratch_operands = 0 : i64, tpu.core_type = #tpu.core_type<tc>, window_params = [{transform_indices = @transform_0, window_bounds = array<i64: 16, 147>}, {pipeline_mode = #tpu.pipeline_mode<synchronous>, transform_indices = @transform_1, window_bounds = array<i64: 147, 256>}, {pipeline_mode = #tpu.pipeline_mode<synchronous>, transform_indices = @transform_2, window_bounds = array<i64: 1, 256>}, {pipeline_mode = #tpu.pipeline_mode<synchronous>, transform_indices = @transform_3, window_bounds = array<i64: 256, 128>}, {pipeline_mode = #tpu.pipeline_mode<synchronous>, transform_indices = @transform_4, window_bounds = array<i64: 1, 128>}, {pipeline_mode = #tpu.pipeline_mode<synchronous>, transform_indices = @transform_5, window_bounds = array<i64: 1, 128>}, {pipeline_mode = #tpu.pipeline_mode<synchronous>, transform_indices = @transform_6, window_bounds = array<i64: 1, 1>}, {transform_indices = @transform_7, window_bounds = array<i64: 1, 16>}]} {
    %c0 = arith.constant 0 : index
    %c0_0 = arith.constant 0 : index
    %0 = vector.load %arg1[%c0, %c0_0] : memref<16x147xf32, #tpu.memory_space<vmem>>, vector<16x147xf32>
    %1 = arith.truncf %0 : vector<16x147xf32> to vector<16x147xbf16>
    %c0_1 = arith.constant 0 : index
    %c0_2 = arith.constant 0 : index
    %2 = vector.load %arg2[%c0_1, %c0_2] : memref<147x256xbf16, #tpu.memory_space<vmem>>, vector<147x256xbf16>
    %cst = arith.constant dense<0.000000e+00> : vector<16x256xf32>
    %3 = tpu.matmul %1, %2, %cst {dimension_numbers = #tpu.dot_dimension_numbers<[1], [0], [0], [1], [0, 0, 1, 1], [], []>} : vector<16x147xbf16>, vector<147x256xbf16>, vector<16x256xf32> -> vector<16x256xf32>
    %c0_3 = arith.constant 0 : index
    %c0_4 = arith.constant 0 : index
    %4 = vector.load %arg3[%c0_3, %c0_4] : memref<1x256xf32, #tpu.memory_space<vmem>>, vector<1x256xf32>
    %5 = vector.broadcast %4 : vector<1x256xf32> to vector<16x256xf32>
    %6 = arith.addf %3, %5 : vector<16x256xf32>
    %cst_5 = arith.constant 0.000000e+00 : f32
    %7 = vector.broadcast %cst_5 : f32 to vector<16x256xf32>
    %8 = arith.maximumf %6, %7 : vector<16x256xf32>
    %9 = arith.truncf %8 : vector<16x256xf32> to vector<16x256xbf16>
    %c0_6 = arith.constant 0 : index
    %c0_7 = arith.constant 0 : index
    %10 = vector.load %arg4[%c0_6, %c0_7] : memref<256x128xbf16, #tpu.memory_space<vmem>>, vector<256x128xbf16>
    %cst_8 = arith.constant dense<0.000000e+00> : vector<16x128xf32>
    %11 = tpu.matmul %9, %10, %cst_8 {dimension_numbers = #tpu.dot_dimension_numbers<[1], [0], [0], [1], [0, 0, 1, 1], [], []>} : vector<16x256xbf16>, vector<256x128xbf16>, vector<16x128xf32> -> vector<16x128xf32>
    %c0_9 = arith.constant 0 : index
    %c0_10 = arith.constant 0 : index
    %12 = vector.load %arg5[%c0_9, %c0_10] : memref<1x128xf32, #tpu.memory_space<vmem>>, vector<1x128xf32>
    %13 = vector.broadcast %12 : vector<1x128xf32> to vector<16x128xf32>
    %14 = arith.addf %11, %13 : vector<16x128xf32>
    %cst_11 = arith.constant 0.000000e+00 : f32
    %15 = vector.broadcast %cst_11 : f32 to vector<16x128xf32>
    %16 = arith.maximumf %14, %15 : vector<16x128xf32>
    %c0_12 = arith.constant 0 : index
    %c0_13 = arith.constant 0 : index
    %17 = vector.load %arg6[%c0_12, %c0_13] : memref<1x128xbf16, #tpu.memory_space<vmem>>, vector<1x128xbf16>
    %18 = arith.truncf %16 : vector<16x128xf32> to vector<16x128xbf16>
    %cst_14 = arith.constant dense<0.000000e+00> : vector<1x16xf32>
    %19 = tpu.matmul %17, %18, %cst_14 {dimension_numbers = #tpu.dot_dimension_numbers<[1], [1], [0], [0], [0, 0, 1, 0], [], []>} : vector<1x128xbf16>, vector<16x128xbf16>, vector<1x16xf32> -> vector<1x16xf32>
    %c0_15 = arith.constant 0 : index
    %c0_16 = arith.constant 0 : index
    %20 = vector.load %arg7[%c0_15, %c0_16] : memref<1x1xf32, #tpu.memory_space<vmem>>, vector<1x1xf32>
    %21 = vector.broadcast %20 : vector<1x1xf32> to vector<1x16xf32>
    %22 = arith.addf %19, %21 : vector<1x16xf32>
    %23 = arith.negf %22 : vector<1x16xf32>
    %24 = math.exp %23 : vector<1x16xf32>
    %cst_17 = arith.constant 1.000000e+00 : f32
    %25 = vector.broadcast %cst_17 : f32 to vector<1x16xf32>
    %26 = arith.addf %25, %24 : vector<1x16xf32>
    %27 = arith.divf %25, %26 : vector<1x16xf32>
    %c0_18 = arith.constant 0 : index
    %c0_19 = arith.constant 0 : index
    %28 = vector.load %arg8[%c0_18, %c0_19] : memref<1x16xf32, #tpu.memory_space<vmem>>, vector<1x16xf32>
    tpu.vector_store %arg8[%c0_18, %c0_19], %27 {strides = array<i32>} : memref<1x16xf32, #tpu.memory_space<vmem>>, vector<1x16xf32>,
    return
  }
  func.func @transform_0(%arg0: i32) -> (i32, i32) {
    %c0_i32 = arith.constant 0 : i32
    %c0_i32_0 = arith.constant 0 : i32
    return %arg0, %c0_i32 : i32, i32
  }
  func.func @transform_1(%arg0: i32) -> (i32, i32) {
    %c0_i32 = arith.constant 0 : i32
    %c0_i32_0 = arith.constant 0 : i32
    %c0_i32_1 = arith.constant 0 : i32
    return %c0_i32, %c0_i32_0 : i32, i32
  }
  func.func @transform_2(%arg0: i32) -> (i32, i32) {
    %c0_i32 = arith.constant 0 : i32
    %c0_i32_0 = arith.constant 0 : i32
    %c0_i32_1 = arith.constant 0 : i32
    return %c0_i32, %c0_i32_0 : i32, i32
  }
  func.func @transform_3(%arg0: i32) -> (i32, i32) {
    %c0_i32 = arith.constant 0 : i32
    %c0_i32_0 = arith.constant 0 : i32
    %c0_i32_1 = arith.constant 0 : i32
    return %c0_i32, %c0_i32_0 : i32, i32
  }
  func.func @transform_4(%arg0: i32) -> (i32, i32) {
    %c0_i32 = arith.constant 0 : i32
    %c0_i32_0 = arith.constant 0 : i32
    %c0_i32_1 = arith.constant 0 : i32
    return %c0_i32, %c0_i32_0 : i32, i32
  }
  func.func @transform_5(%arg0: i32) -> (i32, i32) {
    %c0_i32 = arith.constant 0 : i32
    %c0_i32_0 = arith.constant 0 : i32
    %c0_i32_1 = arith.constant 0 : i32
    return %c0_i32, %c0_i32_0 : i32, i32
  }
  func.func @transform_6(%arg0: i32) -> (i32, i32) {
    %c0_i32 = arith.constant 0 : i32
    %c0_i32_0 = arith.constant 0 : i32
    %c0_i32_1 = arith.constant 0 : i32
    return %c0_i32, %c0_i32_0 : i32, i32
  }
  func.func @transform_7(%arg0: i32) -> (i32, i32) {
    %c0_i32 = arith.constant 0 : i32
    %c0_i32_0 = arith.constant 0 : i32
    return %c0_i32, %arg0 : i32, i32
  }
}

</mosaic_0001>

<llo_original>
// kernel: simple_mlp_forward.1
$region0: #{simple_mlp_forward.1}
  #allocation0 [shape = 'u32[]', space=smem, size = 0x4, offset = 0x4, fixed_abs, tag = 'smem constant byte address 0x4 - core index']
  #allocation1 [shape = 'u32[144,128]{1,0:T(1,128)}', space=vmem, size = 0x12000, scoped, tag = 'internal scratch']
  #allocation2 [shape = 'f32[1,1]{1,0:T(1,128)S(1)}', space=vmem, size = 0x200, scoped, tag = 'scoped memory for simple_mlp_forward.1']
  %s0 = inlined_call_operand.hbm [shape: f32[16,147], index: 0, kind: input, shape index: {}]
  %s1 = inlined_call_operand.hbm [shape: bf16[147,256], index: 1, kind: input, shape index: {}]
  %s2 = inlined_call_operand.vmem [shape: f32[1,256], index: 2, kind: input, shape index: {}]
  %s3 = inlined_call_operand.hbm [shape: bf16[256,128], index: 3, kind: input, shape index: {}]
  %s4 = inlined_call_operand.vmem [shape: f32[1,128], index: 4, kind: input, shape index: {}]
  %s5 = inlined_call_operand.vmem [shape: bf16[1,128], index: 5, kind: input, shape index: {}]
  %s6 = inlined_call_operand.<no memory space> [shape: f32[1,1], index: 6, kind: input, shape index: {}]
  %s7 = inlined_call_operand.hbm [shape: f32[1,16], index: 7, kind: output, shape index: {}]
  %s8 = sld [smem:[#allocation0]]
  $region50: #{simple_mlp_forward.1} parent=0
    _
  %s10 = ssub.s32 1, %s8
  %s11 = scalar_select 0, %s10, %s8
  %v12 = vstv %s6
  %13 = vst [vmem:[#allocation2] sm:$0x1] %v12
  $region1: #{simple_mlp_forward.1} parent=0
    #allocation3 [shape = 'u8[16384]{0}', space=vmem, size = 0x4000, scoped, tag = 'input window, operand 0, single buffered']
    #allocation4 [shape = 's32[1]{0}', space=sflag, size = 0x4, scoped, tag = 'scoped memory for simple_mlp_forward.1']
    #allocation5 [shape = 's32[1]{0}', space=sflag, size = 0x4, scoped, tag = 'scoped memory for simple_mlp_forward.1']
    #allocation6 [shape = 'u8[77824]{0}', space=vmem, size = 0x13000, scoped, tag = 'input window, operand 1, single buffered']
    #allocation7 [shape = 's32[1]{0}', space=sflag, size = 0x4, scoped, tag = 'scoped memory for simple_mlp_forward.1']
    #allocation8 [shape = 'u8[65536]{0}', space=vmem, size = 0x10000, scoped, tag = 'input window, operand 3, single buffered']
    #allocation9 [shape = 'u8[512]{0}', space=vmem, size = 0x400, scoped, tag = 'output window, operand 0, single buffered']
    %14 = vsyncpa [#allocation4], 0
    %15 = vsyncpa [#allocation7], 0
    %16 = vsyncpa [#allocation5], 0
    // Predicated region
    $region2: #{simple_mlp_forward.1} parent=1 // pred_check
      _
    $region3: #{simple_mlp_forward.1} parent=1 // pred_check_branch
      %18 = sbr.rel (0) target = $region5
    $region4: #{simple_mlp_forward.1} parent=1 // pred_region
      %s20 = ssub.s32 512, 512
      %21 = vsyncadd [#allocation4], %s20
      %s22 = sshll.u32 [#allocation3], 4
      %s23 = int_to_ptr.vmem [resolvable:$true] %s22
      %28 = dma.hbm_to_vmem [thread:$0]  %s0, 512, %s23, [#allocation4], 256, 256, 16
    $region5: #{simple_mlp_forward.1} parent=1 // pred_fallthru
      _
    // Predicated region
    $region6: #{simple_mlp_forward.1} parent=1 // pred_check
      _
    $region7: #{simple_mlp_forward.1} parent=1 // pred_check_branch
      %30 = sbr.rel (0) target = $region9
    $region8: #{simple_mlp_forward.1} parent=1 // pred_region
      %s32 = ssub.s32 2432, 2432
      %33 = vsyncadd [#allocation7], %s32
      %s34 = sshll.u32 [#allocation6], 4
      %s35 = int_to_ptr.vmem [resolvable:$true] %s34
      %40 = dma.hbm_to_vmem [thread:$0]  %s1, 2432, %s35, [#allocation7], 128, 128, 8
    $region9: #{simple_mlp_forward.1} parent=1 // pred_fallthru
      _
    // Predicated region
    $region10: #{simple_mlp_forward.1} parent=1 // pred_check
      _
    $region11: #{simple_mlp_forward.1} parent=1 // pred_check_branch
      %42 = sbr.rel (0) target = $region13
    $region12: #{simple_mlp_forward.1} parent=1 // pred_region
      _
    $region13: #{simple_mlp_forward.1} parent=1 // pred_fallthru
      _
    // Predicated region
    $region14: #{simple_mlp_forward.1} parent=1 // pred_check
      _
    $region15: #{simple_mlp_forward.1} parent=1 // pred_check_branch
      %44 = sbr.rel (0) target = $region17
    $region16: #{simple_mlp_forward.1} parent=1 // pred_region
      %s46 = ssub.s32 2048, 2048
      %47 = vsyncadd [#allocation7], %s46
      %s48 = sshll.u32 [#allocation8], 4
      %s49 = int_to_ptr.vmem [resolvable:$true] %s48
      %54 = dma.hbm_to_vmem [thread:$0]  %s3, 2048, %s49, [#allocation7], 64, 64, 4
    $region17: #{simple_mlp_forward.1} parent=1 // pred_fallthru
      _
    // Predicated region
    $region18: #{simple_mlp_forward.1} parent=1 // pred_check
      _
    $region19: #{simple_mlp_forward.1} parent=1 // pred_check_branch
      %56 = sbr.rel (0) target = $region21
    $region20: #{simple_mlp_forward.1} parent=1 // pred_region
      _
    $region21: #{simple_mlp_forward.1} parent=1 // pred_fallthru
      _
    // Predicated region
    $region22: #{simple_mlp_forward.1} parent=1 // pred_check
      _
    $region23: #{simple_mlp_forward.1} parent=1 // pred_check_branch
      %58 = sbr.rel (0) target = $region25
    $region24: #{simple_mlp_forward.1} parent=1 // pred_region
      _
    $region25: #{simple_mlp_forward.1} parent=1 // pred_fallthru
      _
    // Predicated region
    $region26: #{simple_mlp_forward.1} parent=1 // pred_check
      _
    $region27: #{simple_mlp_forward.1} parent=1 // pred_check_branch
      %60 = sbr.rel (0) target = $region29
    $region28: #{simple_mlp_forward.1} parent=1 // pred_region
      _
    $region29: #{simple_mlp_forward.1} parent=1 // pred_fallthru
      _
    // Predicated region
    $region30: #{simple_mlp_forward.1} parent=1 // pred_check
      _
    $region31: #{simple_mlp_forward.1} parent=1 // pred_check_branch
      %62 = sbr.rel (0) target = $region33
    $region32: #{simple_mlp_forward.1} parent=1 // pred_region
      %63 = dma.done [#allocation4], 512
    $region33: #{simple_mlp_forward.1} parent=1 // pred_fallthru
      _
    // Predicated region
    $region34: #{simple_mlp_forward.1} parent=1 // pred_check
      _
    $region35: #{simple_mlp_forward.1} parent=1 // pred_check_branch
      %65 = sbr.rel (0) target = $region37
    $region36: #{simple_mlp_forward.1} parent=1 // pred_region
      %66 = dma.done [#allocation7], 2432
    $region37: #{simple_mlp_forward.1} parent=1 // pred_fallthru
      _
    // Predicated region
    $region38: #{simple_mlp_forward.1} parent=1 // pred_check
      _
    $region39: #{simple_mlp_forward.1} parent=1 // pred_check_branch
      %68 = sbr.rel (0) target = $region41
    $region40: #{simple_mlp_forward.1} parent=1 // pred_region
      %69 = dma.done [#allocation7], 2048
    $region41: #{simple_mlp_forward.1} parent=1 // pred_fallthru
      _
    %v71 = vld [vmem:[#allocation3] sm:$0xff]
    %v72 = vld [vmem:[#allocation3 + $0x8] sm:$0xff]
    %v73 = vld [vmem:[#allocation3 + $0x10] sm:$0xff]
    %v74 = vld [vmem:[#allocation3 + $0x18] sm:$0xff]
    %v75 = vpack.c.bf16 %v73, %v71
    %v76 = vpack.c.bf16 %v74, %v72
    %v77 = vld [vmem:[#allocation6] sm:$0xff]
    %v78 = vld [vmem:[#allocation6 + $0x8] sm:$0xff]
    %v79 = vld [vmem:[#allocation6 + $0x10] sm:$0xff]
    %v80 = vld [vmem:[#allocation6 + $0x18] sm:$0xff]
    %v81 = vld [vmem:[#allocation6 + $0x20] sm:$0xff]
    %v82 = vld [vmem:[#allocation6 + $0x28] sm:$0xff]
    %v83 = vld [vmem:[#allocation6 + $0x30] sm:$0xff]
    %v84 = vld [vmem:[#allocation6 + $0x38] sm:$0xff]
    %v85 = vld [vmem:[#allocation6 + $0x40] sm:$0xff]
    %v86 = vld [vmem:[#allocation6 + $0x48] sm:$0xff]
    %v87 = vld [vmem:[#allocation6 + $0x50] sm:$0xff]
    %v88 = vld [vmem:[#allocation6 + $0x58] sm:$0xff]
    %v89 = vld [vmem:[#allocation6 + $0x60] sm:$0xff]
    %v90 = vld [vmem:[#allocation6 + $0x68] sm:$0xff]
    %v91 = vld [vmem:[#allocation6 + $0x70] sm:$0xff]
    %v92 = vld [vmem:[#allocation6 + $0x78] sm:$0xff]
    %v93 = vld [vmem:[#allocation6 + $0x80] sm:$0xff]
    %v94 = vld [vmem:[#allocation6 + $0x88] sm:$0xff]
    %v95 = vld [vmem:[#allocation6 + $0x90] sm:$0x33]
    %v96 = vld [vmem:[%s2] sm:$0x3]
    %v98 = vlaneseq
    %v99 = vshrl.u32 %v98, 7
    %v100 = vsub.s32 0, %v99
    %v101 = vrot.slane %v96, %v100
    %v102 = vlaneseq
    %v103 = vshrl.u32 %v102, 7
    %v104 = vsub.s32 1, %v103
    %v105 = vrot.slane %v96, %v104
    %v127 = vunpack.c.l.b16 %v77
    %v128 = vunpack.c.h.b16 %v77
    %v129 = vunpack.c.l.b16 %v78
    %v130 = vunpack.c.h.b16 %v78
    %v131 = vunpack.c.l.b16 %v79
    %v132 = vunpack.c.h.b16 %v79
    %v133 = vunpack.c.l.b16 %v80
    %v134 = vunpack.c.h.b16 %v80
    %v135 = vunpack.c.l.b16 %v81
    %v136 = vunpack.c.h.b16 %v81
    %v137 = vunpack.c.l.b16 %v82
    %v138 = vunpack.c.h.b16 %v82
    %v139 = vunpack.c.l.b16 %v83
    %v140 = vunpack.c.h.b16 %v83
    %v141 = vunpack.c.l.b16 %v84
    %v142 = vunpack.c.h.b16 %v84
    %v143 = vunpack.c.l.b16 %v85
    %v144 = vunpack.c.h.b16 %v85
    %v145 = vunpack.c.l.b16 %v86
    %v146 = vunpack.c.h.b16 %v86
    %v147 = vunpack.c.l.b16 %v87
    %v148 = vunpack.c.h.b16 %v87
    %v149 = vunpack.c.l.b16 %v88
    %v150 = vunpack.c.h.b16 %v88
    %v151 = vunpack.c.l.b16 %v89
    %v152 = vunpack.c.h.b16 %v89
    %v153 = vunpack.c.l.b16 %v90
    %v154 = vunpack.c.h.b16 %v90
    %v155 = vunpack.c.l.b16 %v91
    %v156 = vunpack.c.h.b16 %v91
    %v157 = vunpack.c.l.b16 %v92
    %v158 = vunpack.c.h.b16 %v92
    %v159 = vunpack.c.l.b16 %v93
    %v160 = vunpack.c.h.b16 %v93
    %v161 = vunpack.c.l.b16 %v94
    %v162 = vunpack.c.h.b16 %v94
    %v163 = vunpack.c.l.b16 %v95
    %v164 = vunpack.c.h.b16 %v95
    %v165 = vpack.c.b16 %v129, %v127
    %v166 = vpack.c.b16 %v130, %v128
    %v167 = vpack.c.b16 %v133, %v131
    %v168 = vpack.c.b16 %v134, %v132
    %v169 = vpack.c.b16 %v137, %v135
    %v170 = vpack.c.b16 %v138, %v136
    %v171 = vpack.c.b16 %v141, %v139
    %v172 = vpack.c.b16 %v142, %v140
    %v173 = vpack.c.b16 %v145, %v143
    %v174 = vpack.c.b16 %v146, %v144
    %v175 = vpack.c.b16 %v149, %v147
    %v176 = vpack.c.b16 %v150, %v148
    %v177 = vpack.c.b16 %v153, %v151
    %v178 = vpack.c.b16 %v154, %v152
    %v179 = vpack.c.b16 %v157, %v155
    %v180 = vpack.c.b16 %v158, %v156
    %v181 = vpack.c.b16 %v161, %v159
    %v182 = vpack.c.b16 %v162, %v160
    %v183 = vpack.c.b16 %v163, %v163
    %v184 = vpack.c.b16 %v164, %v164
    %vm203 = vcmask 154624
    %v205 = vsel %vm203, %v76, 0
    %vm207 = vcmask 1040384
    %vm208 = vcmask 1041408
    %v209 = vsel %vm207, 4294967295, 65535
    %v210 = vsel %vm208, %v209, 0
    %v212 = vand.u32 %v183, %v210
    %v215 = vand.u32 %v184, %v210
    %217 = vmatprep.subr.bf16.mxu0 %v166
    %218 = vmatpush1.bf16.msra.mxu0 %v165
    %219 = vmatprep.subr.bf16.mxu0 %v168
    %220 = vmatpush1.bf16.msra.mxu0 %v167
    %221 = vmatprep.subr.bf16.mxu0 %v170
    %222 = vmatpush1.bf16.msra.mxu0 %v169
    %223 = vmatprep.subr.bf16.mxu0 %v172
    %224 = vmatpush1.bf16.msra.mxu0 %v171
    %225 = vmatprep.subr.bf16.mxu0 %v174
    %226 = vmatpush1.bf16.msra.mxu0 %v173
    %227 = vmatprep.subr.bf16.mxu0 %v176
    %228 = vmatpush1.bf16.msra.mxu0 %v175
    %229 = vmatprep.subr.bf16.mxu0 %v178
    %230 = vmatpush1.bf16.msra.mxu0 %v177
    %231 = vmatprep.subr.bf16.mxu0 %v180
    %232 = vmatpush1.bf16.msra.mxu0 %v179
    %233 = vmatprep.subr.bf16.mxu0 %v182
    %234 = vmatpush1.bf16.msra.mxu0 %v181
    %235 = vmatprep.subr.bf16.mxu0 %v215
    %236 = vmatpush1.bf16.msra.mxu0 %v212
    %237 = vmatprep.subr.bf16.mxu0 0
    %238 = vmatpush1.bf16.msra.mxu0 0
    %239 = vmatprep.subr.bf16.mxu0 0
    %240 = vmatpush1.bf16.msra.mxu0 0
    %241 = vmatprep.subr.bf16.mxu0 0
    %242 = vmatpush1.bf16.msra.mxu0 0
    %243 = vmatprep.subr.bf16.mxu0 0
    %244 = vmatpush1.bf16.msra.mxu0 0
    %245 = vmatprep.subr.bf16.mxu0 0
    %246 = vmatpush1.bf16.msra.mxu0 0
    %247 = vmatprep.subr.bf16.mxu0 0
    %248 = vmatpush1.bf16.msra.mxu0 0
    %249 = vmatprep.mubr.bf16.mxu0 %v205
    %250 = vmatmul.mubr.bf16.gmra.mrb[0].mxu0 %v75
    %v251 = vpop.f32.mrb[0].mxu0
    %v252 = vadd.f32 %v101, %v251
    %v253 = vpop.f32.mrb[0].mxu0
    %v254 = vadd.f32 %v105, %v253
    %v255 = vpop.f32.mrb[0].mxu0
    %v256 = vadd.f32 %v101, %v255
    %v257 = vpop.f32.mrb[0].mxu0
    %v258 = vadd.f32 %v105, %v257
    %259 = vdwg.mxu0
    %v260 = vmax.f32 %v252, 0.0
    %v261 = vmax.f32 %v254, 0.0
    %v262 = vmax.f32 %v256, 0.0
    %v263 = vmax.f32 %v258, 0.0
    %v264 = vpack.c.bf16 %v262, %v260
    %v265 = vpack.c.bf16 %v263, %v261
    %v266 = vld [vmem:[#allocation8] sm:$0xf]
    %v267 = vld [vmem:[#allocation8 + $0x4] sm:$0xf]
    %v268 = vld [vmem:[#allocation8 + $0x8] sm:$0xf]
    %v269 = vld [vmem:[#allocation8 + $0xc] sm:$0xf]
    %v270 = vld [vmem:[#allocation8 + $0x10] sm:$0xf]
    %v271 = vld [vmem:[#allocation8 + $0x14] sm:$0xf]
    %v272 = vld [vmem:[#allocation8 + $0x18] sm:$0xf]
    %v273 = vld [vmem:[#allocation8 + $0x1c] sm:$0xf]
    %v274 = vld [vmem:[#allocation8 + $0x20] sm:$0xf]
    %v275 = vld [vmem:[#allocation8 + $0x24] sm:$0xf]
    %v276 = vld [vmem:[#allocation8 + $0x28] sm:$0xf]
    %v277 = vld [vmem:[#allocation8 + $0x2c] sm:$0xf]
    %v278 = vld [vmem:[#allocation8 + $0x30] sm:$0xf]
    %v279 = vld [vmem:[#allocation8 + $0x34] sm:$0xf]
    %v280 = vld [vmem:[#allocation8 + $0x38] sm:$0xf]
    %v281 = vld [vmem:[#allocation8 + $0x3c] sm:$0xf]
    %v282 = vld [vmem:[#allocation8 + $0x40] sm:$0xf]
    %v283 = vld [vmem:[#allocation8 + $0x44] sm:$0xf]
    %v284 = vld [vmem:[#allocation8 + $0x48] sm:$0xf]
    %v285 = vld [vmem:[#allocation8 + $0x4c] sm:$0xf]
    %v286 = vld [vmem:[#allocation8 + $0x50] sm:$0xf]
    %v287 = vld [vmem:[#allocation8 + $0x54] sm:$0xf]
    %v288 = vld [vmem:[#allocation8 + $0x58] sm:$0xf]
    %v289 = vld [vmem:[#allocation8 + $0x5c] sm:$0xf]
    %v290 = vld [vmem:[#allocation8 + $0x60] sm:$0xf]
    %v291 = vld [vmem:[#allocation8 + $0x64] sm:$0xf]
    %v292 = vld [vmem:[#allocation8 + $0x68] sm:$0xf]
    %v293 = vld [vmem:[#allocation8 + $0x6c] sm:$0xf]
    %v294 = vld [vmem:[#allocation8 + $0x70] sm:$0xf]
    %v295 = vld [vmem:[#allocation8 + $0x74] sm:$0xf]
    %v296 = vld [vmem:[#allocation8 + $0x78] sm:$0xf]
    %v297 = vld [vmem:[#allocation8 + $0x7c] sm:$0xf]
    %v298 = vld [vmem:[%s4] sm:$0x1]
    %v300 = vlaneseq
    %v301 = vshrl.u32 %v300, 7
    %v302 = vsub.s32 0, %v301
    %v303 = vrot.slane %v298, %v302
    %v337 = vunpack.c.l.b16 %v266
    %v338 = vunpack.c.l.b16 %v267
    %v339 = vunpack.c.l.b16 %v268
    %v340 = vunpack.c.l.b16 %v269
    %v341 = vunpack.c.l.b16 %v270
    %v342 = vunpack.c.l.b16 %v271
    %v343 = vunpack.c.l.b16 %v272
    %v344 = vunpack.c.l.b16 %v273
    %v345 = vunpack.c.l.b16 %v274
    %v346 = vunpack.c.l.b16 %v275
    %v347 = vunpack.c.l.b16 %v276
    %v348 = vunpack.c.l.b16 %v277
    %v349 = vunpack.c.l.b16 %v278
    %v350 = vunpack.c.l.b16 %v279
    %v351 = vunpack.c.l.b16 %v280
    %v352 = vunpack.c.l.b16 %v281
    %v353 = vunpack.c.l.b16 %v282
    %v354 = vunpack.c.l.b16 %v283
    %v355 = vunpack.c.l.b16 %v284
    %v356 = vunpack.c.l.b16 %v285
    %v357 = vunpack.c.l.b16 %v286
    %v358 = vunpack.c.l.b16 %v287
    %v359 = vunpack.c.l.b16 %v288
    %v360 = vunpack.c.l.b16 %v289
    %v361 = vunpack.c.l.b16 %v290
    %v362 = vunpack.c.l.b16 %v291
    %v363 = vunpack.c.l.b16 %v292
    %v364 = vunpack.c.l.b16 %v293
    %v365 = vunpack.c.l.b16 %v294
    %v366 = vunpack.c.l.b16 %v295
    %v367 = vunpack.c.l.b16 %v296
    %v368 = vunpack.c.l.b16 %v297
    %v369 = vpack.c.b16 %v338, %v337
    %v370 = vpack.c.b16 %v340, %v339
    %v371 = vpack.c.b16 %v342, %v341
    %v372 = vpack.c.b16 %v344, %v343
    %v373 = vpack.c.b16 %v346, %v345
    %v374 = vpack.c.b16 %v348, %v347
    %v375 = vpack.c.b16 %v350, %v349
    %v376 = vpack.c.b16 %v352, %v351
    %v377 = vpack.c.b16 %v354, %v353
    %v378 = vpack.c.b16 %v356, %v355
    %v379 = vpack.c.b16 %v358, %v357
    %v380 = vpack.c.b16 %v360, %v359
    %v381 = vpack.c.b16 %v362, %v361
    %v382 = vpack.c.b16 %v364, %v363
    %v383 = vpack.c.b16 %v366, %v365
    %v384 = vpack.c.b16 %v368, %v367
    %401 = vmatprep.subr.bf16.mxu0 0
    %402 = vmatpush1.bf16.msra.mxu0 %v369
    %403 = vmatprep.subr.bf16.mxu0 0
    %404 = vmatpush1.bf16.msra.mxu0 %v370
    %405 = vmatprep.subr.bf16.mxu0 0
    %406 = vmatpush1.bf16.msra.mxu0 %v371
    %407 = vmatprep.subr.bf16.mxu0 0
    %408 = vmatpush1.bf16.msra.mxu0 %v372
    %409 = vmatprep.subr.bf16.mxu0 0
    %410 = vmatpush1.bf16.msra.mxu0 %v373
    %411 = vmatprep.subr.bf16.mxu0 0
    %412 = vmatpush1.bf16.msra.mxu0 %v374
    %413 = vmatprep.subr.bf16.mxu0 0
    %414 = vmatpush1.bf16.msra.mxu0 %v375
    %415 = vmatprep.subr.bf16.mxu0 0
    %416 = vmatpush1.bf16.msra.mxu0 %v376
    %417 = vmatprep.subr.bf16.mxu0 0
    %418 = vmatpush1.bf16.msra.mxu0 %v377
    %419 = vmatprep.subr.bf16.mxu0 0
    %420 = vmatpush1.bf16.msra.mxu0 %v378
    %421 = vmatprep.subr.bf16.mxu0 0
    %422 = vmatpush1.bf16.msra.mxu0 %v379
    %423 = vmatprep.subr.bf16.mxu0 0
    %424 = vmatpush1.bf16.msra.mxu0 %v380
    %425 = vmatprep.subr.bf16.mxu0 0
    %426 = vmatpush1.bf16.msra.mxu0 %v381
    %427 = vmatprep.subr.bf16.mxu0 0
    %428 = vmatpush1.bf16.msra.mxu0 %v382
    %429 = vmatprep.subr.bf16.mxu0 0
    %430 = vmatpush1.bf16.msra.mxu0 %v383
    %431 = vmatprep.subr.bf16.mxu0 0
    %432 = vmatpush1.bf16.msra.mxu0 %v384
    %433 = vmatprep.mubr.bf16.mxu0 %v265
    %434 = vmatmul.mubr.bf16.gmra.mrb[0].mxu0 %v264
    %v435 = vpop.f32.mrb[0].mxu0
    %v436 = vadd.f32 %v303, %v435
    %v437 = vpop.f32.mrb[0].mxu0
    %v438 = vpop.f32.mrb[0].mxu0
    %v439 = vadd.f32 %v303, %v438
    %v440 = vpop.f32.mrb[0].mxu0
    %441 = vdwg.mxu0
    %v442 = vmax.f32 %v436, 0.0
    %v443 = vmax.f32 %v439, 0.0
    %v444 = vld [vmem:[%s5] sm:$0x1]
    %v445 = vpack.c.bf16 %v443, %v442
    %v446 = vld [vmem:[#allocation2] sm:$0x1]
    %448 = vset.pattern.permute.xlu0 0
    %449 = vperm.xlu0 %448, %v446
    %v450 = vpop.permute.xlu0 %449
    %v452 = vlaneseq
    %v453 = vshrl.u32 %v452, 7
    %v454 = vsub.s32 0, %v453
    %v455 = vrot.slane %v450, %v454
    %456 = vmatprep.subr.bf16.mxu0 0
    %457 = vmatpush1.bf16.xpose.msra.mxu0 %v445
    %458 = vmatprep.subr.bf16.mxu0 0
    %459 = vmatpush1.bf16.xpose.msra.mxu0 0
    %460 = vmatprep.subr.bf16.mxu0 0
    %461 = vmatpush1.bf16.xpose.msra.mxu0 0
    %462 = vmatprep.subr.bf16.mxu0 0
    %463 = vmatpush1.bf16.xpose.msra.mxu0 0
    %464 = vmatprep.subr.bf16.mxu0 0
    %465 = vmatpush1.bf16.xpose.msra.mxu0 0
    %466 = vmatprep.subr.bf16.mxu0 0
    %467 = vmatpush1.bf16.xpose.msra.mxu0 0
    %468 = vmatprep.subr.bf16.mxu0 0
    %469 = vmatpush1.bf16.xpose.msra.mxu0 0
    %470 = vmatprep.subr.bf16.mxu0 0
    %471 = vmatpush1.bf16.xpose.msra.mxu0 0
    %472 = vmatprep.subr.bf16.mxu0 0
    %473 = vmatpush1.bf16.xpose.msra.mxu0 0
    %474 = vmatprep.subr.bf16.mxu0 0
    %475 = vmatpush1.bf16.xpose.msra.mxu0 0
    %476 = vmatprep.subr.bf16.mxu0 0
    %477 = vmatpush1.bf16.xpose.msra.mxu0 0
    %478 = vmatprep.subr.bf16.mxu0 0
    %479 = vmatpush1.bf16.xpose.msra.mxu0 0
    %480 = vmatprep.subr.bf16.mxu0 0
    %481 = vmatpush1.bf16.xpose.msra.mxu0 0
    %482 = vmatprep.subr.bf16.mxu0 0
    %483 = vmatpush1.bf16.xpose.msra.mxu0 0
    %484 = vmatprep.subr.bf16.mxu0 0
    %485 = vmatpush1.bf16.xpose.msra.mxu0 0
    %486 = vmatprep.subr.bf16.mxu0 0
    %487 = vmatpush1.bf16.xpose.msra.mxu0 0
    %488 = vmatprep.mubr.bf16.mxu0 0
    %489 = vmatmul.mubr.bf16.gmra.mrb[0].mxu0 %v444
    %v490 = vpop.f32.mrb[0].mxu0
    %v491 = vadd.f32 %v455, %v490
    %v492 = vpop.f32.mrb[0].mxu0
    %v493 = vpop.f32.mrb[0].mxu0
    %v494 = vpop.f32.mrb[0].mxu0
    %495 = vdwg.mxu0
    %v496 = vxor.u32 %v491, 2147483648
    %v497 = vmul.f32 %v496, 1.442695
    %v498 = vpow.pop %v497
    %v499 = vadd.f32 %v498, 1.0
    %v500 = vrcp.pop %v499
    %v501 = vmul.f32 1.0, %v500
    %vm502 = vcmask 122880
    %503 = vst.msk [vmem:[#allocation9] sm:$0x1] %vm502, %v501
    // Predicated region
    $region42: #{simple_mlp_forward.1} parent=1 // pred_check
      _
    $region43: #{simple_mlp_forward.1} parent=1 // pred_check_branch
      %505 = sbr.rel (0) target = $region45
    $region44: #{simple_mlp_forward.1} parent=1 // pred_region
      %s507 = ssub.s32 16, 16
      %508 = vsyncadd [#allocation5], %s507
      %s510 = sshll.u32 [#allocation9], 4
      %s511 = int_to_ptr.vmem [resolvable:$true] %s510
      %513 = dma.vmem_to_hbm [thread:$0]  %s511, 16, %s7, [#allocation5]
    $region45: #{simple_mlp_forward.1} parent=1 // pred_fallthru
      _
    // Predicated region
    $region46: #{simple_mlp_forward.1} parent=1 // pred_check
      _
    $region47: #{simple_mlp_forward.1} parent=1 // pred_check_branch
      %515 = sbr.rel (0) target = $region49
    $region48: #{simple_mlp_forward.1} parent=1 // pred_region
      %516 = dma.done [#allocation5], 16
    $region49: #{simple_mlp_forward.1} parent=1 // pred_fallthru
      _
    %517 = vsyncpa [#allocation4], 1
    %518 = vsyncpa [#allocation7], 1
    %519 = vsyncpa [#allocation5], 1

</llo_original>
